<compile_context>
chip_gen: v5e
topology: v5e:2x2
jax: 0.10.0
libtpu: 0.0.40
codegen_flags: <defaults>
</compile_context>

<pallas_src>
import functools

import jax
import jax.numpy as jnp
from jax.experimental import pallas as pl
from jax.experimental.pallas import tpu as pltpu

_LANES = 128
_SUBLANES = 8


def _pow_gamma(om, gamma):
    """om ** gamma, avoiding the log+exp lowering for common fixed gammas."""
    g = float(gamma)
    if g == 0.0:
        return jnp.ones_like(om)
    if g == 0.5:
        return jnp.sqrt(om)
    if g == 1.0:
        return om
    if g == 1.5:
        return om * jnp.sqrt(om)
    if g == 2.0:
        return om * om
    if g == 2.5:
        return om * om * jnp.sqrt(om)
    if g == 3.0:
        return om * om * om
    return om ** g  # general fallback (lowers to log+exp on the EUP)


def _fold_rows(vals):
    """Fold an (R, 128) f32 tile into an (8, 128) partial-sum tile (VPU adds)."""
    r, c = vals.shape
    if r >= _SUBLANES and r % _SUBLANES == 0:
        return vals.reshape(r // _SUBLANES, _SUBLANES, c).sum(axis=0)
    # Rare tiny-input path (single sub-(8,128) tile): reduce rows, park result
    # in sublane 0 of the (8, 128) output block.
    row = jnp.sum(vals, axis=0, keepdims=True)                        # (1, c)
    sub = jax.lax.broadcasted_iota(jnp.int32, (_SUBLANES, c), 0)
    return jnp.where(sub == 0, jnp.broadcast_to(row, (_SUBLANES, c)), 0.0)


def _focal_loss_kernel(x_ref, t_ref, out_ref, *, gamma, valid_last, tile_elems):
    i = pl.program_id(0)
    nsteps = pl.num_programs(0)

    x = x_ref[...].astype(jnp.float32)
    t = t_ref[...].astype(jnp.float32)

    # Numerically-stable BCE-with-logits (matches torch):
    #   bce = max(x, 0) - x*t + log(1 + exp(-|x|))
    bce = jnp.maximum(x, 0.0) - x * t + jnp.log1p(jnp.exp(-jnp.abs(x)))
    pt = jnp.exp(-bce)
    om = jnp.maximum(1.0 - pt, 0.0)      # clamp: guards pow/sqrt against rounding
    fl = _pow_gamma(om, gamma) * bce     # alpha and 1/N applied once in the wrapper

    if valid_last == tile_elems:
        # No padding anywhere: every tile is fully valid, no mask at all.
        out_ref[...] = _fold_rows(fl)
    else:
        tm, tn = fl.shape

        @pl.when(i < nsteps - 1)
        def _steady():
            out_ref[...] = _fold_rows(fl)

        @pl.when(i == nsteps - 1)
        def _last():
            # Only the final tile can contain padded / out-of-range elements.
            idx = (jax.lax.broadcasted_iota(jnp.int32, (tm, tn), 0) * tn
                   + jax.lax.broadcasted_iota(jnp.int32, (tm, tn), 1))
            out_ref[...] = _fold_rows(jnp.where(idx < valid_last, fl, 0.0))


def focal_loss(inputs, targets, alpha=0.8, gamma=1.5, *, tile_rows=2048):
    """Mean binary focal loss over all elements (matches the PyTorch FocalLoss)."""
    assert inputs.shape == targets.shape
    n_valid = int(inputs.size)

    x = jnp.asarray(inputs)
    t = jnp.asarray(targets)
    # bf16/f32 are fed straight through (in-kernel upcast); non-floats -> f32.
    if not jnp.issubdtype(x.dtype, jnp.floating):
        x = x.astype(jnp.float32)
    if not jnp.issubdtype(t.dtype, jnp.floating):
        t = t.astype(jnp.float32)

    if n_valid % _LANES == 0:
        # Zero-copy lane-dense view: no host-side pad pass over the inputs.
        x2 = x.reshape(-1, _LANES)
        t2 = t.reshape(-1, _LANES)
    else:
        # TODO(synk): this fallback pads a copy of the flattened inputs (extra
        # HBM pass); only taken when numel is not a multiple of 128.
        pad = (-n_valid) % _LANES
        x2 = jnp.pad(jnp.ravel(x), (0, pad)).reshape(-1, _LANES)
        t2 = jnp.pad(jnp.ravel(t), (0, pad)).reshape(-1, _LANES)

    m_rows = x2.shape[0]
    # tile_rows=2048 -> 1 MiB f32 per input tile (4 MiB double-buffered working
    # set), within every generation's default scoped-VMEM limit. tile_rows is a
    # multiple of 16 so bf16 sublane packing is also legal for multi-tile grids;
    # a full-extent block is always legal for small inputs.
    tm = min(int(tile_rows), m_rows)
    n_tiles = -(-m_rows // tm)
    tile_elems = tm * _LANES
    valid_last = n_valid - (n_tiles - 1) * tile_elems   # static Python int, no i32 overflow

    kernel = functools.partial(
        _focal_loss_kernel,
        gamma=float(gamma),
        valid_last=int(valid_last),
        tile_elems=int(tile_elems),
    )

    partials = pl.pallas_call(
        kernel,
        out_shape=jax.ShapeDtypeStruct((n_tiles * _SUBLANES, _LANES), jnp.float32),
        grid_spec=pltpu.PrefetchScalarGridSpec(
            num_scalar_prefetch=0,
            grid=(n_tiles,),
            in_specs=[
                pl.BlockSpec((tm, _LANES), lambda i: (i, 0)),
                pl.BlockSpec((tm, _LANES), lambda i: (i, 0)),
            ],
            out_specs=pl.BlockSpec((_SUBLANES, _LANES), lambda i: (i, 0)),
        ),
        compiler_params=pltpu.CompilerParams(
            # Tiles are fully independent (each writes its own partial-sum
            # block), so the v7x megacore may shard the grid across both TCs.
            dimension_semantics=("parallel",),
        ),
    )(x2, t2)

    # Single final reduce + constant (alpha / N) scale outside the hot loop.
    return jnp.sum(partials, dtype=jnp.float32) * (float(alpha) / float(n_valid))


def _focal_loss_ref(inputs, targets, alpha=0.8, gamma=1.5):
    x = inputs.astype(jnp.float32)
    t = targets.astype(jnp.float32)
    bce = jnp.maximum(x, 0.0) - x * t + jnp.log1p(jnp.exp(-jnp.abs(x)))
    pt = jnp.exp(-bce)
    return jnp.mean(alpha * (1.0 - pt) ** gamma * bce)


if __name__ == "__main__":
    key = jax.random.PRNGKey(0)
    k1, k2 = jax.random.split(key)

    # Small NCHW-shaped example (logits + binary targets), like a seg-head output.
    shape = (2, 4, 16, 16)
    logits = jax.random.normal(k1, shape, dtype=jnp.float32) * 2.0
    targets = jax.random.bernoulli(k2, p=0.3, shape=shape).astype(jnp.float32)

    loss = focal_loss(logits, targets, alpha=0.8, gamma=1.5)
    loss = jax.block_until_ready(loss)

    ref = _focal_loss_ref(logits, targets, alpha=0.8, gamma=1.5)
    assert jnp.allclose(loss, ref, rtol=1e-5, atol=1e-6), (loss, ref)

    print("KERNEL_OK")
</pallas_src>

<mosaic_0001>
module attributes {stable_mosaic.version = 11 : i64} {
  func.func @_focal_loss_kernel(%arg0: i32, %arg1: memref<16x128xf32, #tpu.memory_space<vmem>>, %arg2: memref<16x128xf32, #tpu.memory_space<vmem>>, %arg3: memref<8x128xf32, #tpu.memory_space<vmem>>) attributes {dimension_semantics = [#tpu.dimension_semantics<parallel>], iteration_bounds = array<i64: 1>, scalar_prefetch = 0 : i64, scratch_operands = 0 : i64, tpu.core_type = #tpu.core_type<tc>, window_params = [{transform_indices = @transform_0, window_bounds = array<i64: 16, 128>}, {transform_indices = @transform_1, window_bounds = array<i64: 16, 128>}, {transform_indices = @transform_2, window_bounds = array<i64: 8, 128>}]} {
    %c0 = arith.constant 0 : index
    %c0_0 = arith.constant 0 : index
    %0 = vector.load %arg1[%c0, %c0_0] : memref<16x128xf32, #tpu.memory_space<vmem>>, vector<16x128xf32>
    %c0_1 = arith.constant 0 : index
    %c0_2 = arith.constant 0 : index
    %1 = vector.load %arg2[%c0_1, %c0_2] : memref<16x128xf32, #tpu.memory_space<vmem>>, vector<16x128xf32>
    %cst = arith.constant 0.000000e+00 : f32
    %2 = vector.broadcast %cst : f32 to vector<16x128xf32>
    %3 = arith.maximumf %0, %2 : vector<16x128xf32>
    %4 = arith.mulf %0, %1 : vector<16x128xf32>
    %5 = arith.subf %3, %4 : vector<16x128xf32>
    %6 = math.absf %0 : vector<16x128xf32>
    %cst_3 = arith.constant 0.000000e+00 : f32
    %7 = vector.broadcast %cst_3 : f32 to vector<16x128xf32>
    %8 = arith.subf %7, %6 : vector<16x128xf32>
    %9 = math.exp %8 : vector<16x128xf32>
    %10 = math.log1p %9 : vector<16x128xf32>
    %11 = arith.addf %5, %10 : vector<16x128xf32>
    %cst_4 = arith.constant 0.000000e+00 : f32
    %12 = vector.broadcast %cst_4 : f32 to vector<16x128xf32>
    %13 = arith.subf %12, %11 : vector<16x128xf32>
    %14 = math.exp %13 : vector<16x128xf32>
    %cst_5 = arith.constant 1.000000e+00 : f32
    %15 = vector.broadcast %cst_5 : f32 to vector<16x128xf32>
    %16 = arith.subf %15, %14 : vector<16x128xf32>
    %cst_6 = arith.constant 0.000000e+00 : f32
    %17 = vector.broadcast %cst_6 : f32 to vector<16x128xf32>
    %18 = arith.maximumf %16, %17 : vector<16x128xf32>
    %19 = math.sqrt %18 : vector<16x128xf32>
    %20 = arith.mulf %18, %19 : vector<16x128xf32>
    %21 = arith.mulf %20, %11 : vector<16x128xf32>
    %22 = vector.shape_cast %21 : vector<16x128xf32> to vector<2x8x128xf32>
    %cst_7 = arith.constant dense<0.000000e+00> : vector<8x128xf32>
    %23 = vector.multi_reduction <add>, %22, %cst_7 [0] : vector<2x8x128xf32> to vector<8x128xf32>
    %c0_8 = arith.constant 0 : index
    %c0_9 = arith.constant 0 : index
    %24 = vector.load %arg3[%c0_8, %c0_9] : memref<8x128xf32, #tpu.memory_space<vmem>>, vector<8x128xf32>
    tpu.vector_store %arg3[%c0_8, %c0_9], %23 {strides = array<i32>} : memref<8x128xf32, #tpu.memory_space<vmem>>, vector<8x128xf32>,
    return
  }
  func.func @transform_0(%arg0: i32) -> (i32, i32) {
    %c0_i32 = arith.constant 0 : i32
    %c0_i32_0 = arith.constant 0 : i32
    return %arg0, %c0_i32 : i32, i32
  }
  func.func @transform_1(%arg0: i32) -> (i32, i32) {
    %c0_i32 = arith.constant 0 : i32
    %c0_i32_0 = arith.constant 0 : i32
    return %arg0, %c0_i32 : i32, i32
  }
  func.func @transform_2(%arg0: i32) -> (i32, i32) {
    %c0_i32 = arith.constant 0 : i32
    %c0_i32_0 = arith.constant 0 : i32
    return %arg0, %c0_i32 : i32, i32
  }
}

</mosaic_0001>

<llo_original>
// kernel: tpu_custom_call.1
$region0: #{tpu_custom_call.1}
  #allocation0 [shape = 'u32[]', space=smem, size = 0x4, offset = 0x4, fixed_abs, tag = 'smem constant byte address 0x4 - core index']
  #allocation1 [shape = 'u32[72,128]{1,0:T(1,128)}', space=vmem, size = 0x9000, scoped, tag = 'internal scratch']
  %s0 = inlined_call_operand.hbm [shape: f32[16,128], index: 0, kind: input, shape index: {}]
  %s1 = inlined_call_operand.hbm [shape: f32[16,128], index: 1, kind: input, shape index: {}]
  %s2 = inlined_call_operand.hbm [shape: f32[8,128], index: 2, kind: output, shape index: {}]
  %s3 = sld [smem:[#allocation0]]
  $region26: #{tpu_custom_call.1} parent=0
    _
  %s5 = ssub.s32 1, %s3
  %s6 = scalar_select 0, %s5, %s3
  $region1: #{tpu_custom_call.1} parent=0
    #allocation2 [shape = 'u8[8192]{0}', space=vmem, size = 0x2000, scoped, tag = 'input window, operand 0, single buffered']
    #allocation3 [shape = 's32[1]{0}', space=sflag, size = 0x4, scoped, tag = 'scoped memory for tpu_custom_call.1']
    #allocation4 [shape = 's32[1]{0}', space=sflag, size = 0x4, scoped, tag = 'scoped memory for tpu_custom_call.1']
    #allocation5 [shape = 'u8[8192]{0}', space=vmem, size = 0x2000, scoped, tag = 'input window, operand 1, single buffered']
    #allocation6 [shape = 's32[1]{0}', space=sflag, size = 0x4, scoped, tag = 'scoped memory for tpu_custom_call.1']
    #allocation7 [shape = 'u8[4096]{0}', space=vmem, size = 0x1000, scoped, tag = 'output window, operand 0, single buffered']
    %7 = vsyncpa [#allocation3], 0
    %8 = vsyncpa [#allocation6], 0
    %9 = vsyncpa [#allocation4], 0
    // Predicated region
    $region2: #{tpu_custom_call.1} parent=1 // pred_check
      _
    $region3: #{tpu_custom_call.1} parent=1 // pred_check_branch
      %11 = sbr.rel (0) target = $region5
    $region4: #{tpu_custom_call.1} parent=1 // pred_region
      %13 = vsyncadd [#allocation3], 0
      %s14 = sshll.u32 %s0, 4
      %s15 = int_to_ptr.hbm [resolvable:$true] %s14
      %s16 = sshll.u32 [#allocation2], 4
      %s17 = int_to_ptr.vmem [resolvable:$true] %s16
      %22 = dma.hbm_to_vmem [thread:$0]  %s15, 256, %s17, [#allocation3], 128, 128, 8
    $region5: #{tpu_custom_call.1} parent=1 // pred_fallthru
      _
    // Predicated region
    $region6: #{tpu_custom_call.1} parent=1 // pred_check
      _
    $region7: #{tpu_custom_call.1} parent=1 // pred_check_branch
      %24 = sbr.rel (0) target = $region9
    $region8: #{tpu_custom_call.1} parent=1 // pred_region
      %26 = vsyncadd [#allocation6], 0
      %s27 = sshll.u32 %s1, 4
      %s28 = int_to_ptr.hbm [resolvable:$true] %s27
      %s29 = sshll.u32 [#allocation5], 4
      %s30 = int_to_ptr.vmem [resolvable:$true] %s29
      %35 = dma.hbm_to_vmem [thread:$0]  %s28, 256, %s30, [#allocation6], 128, 128, 8
    $region9: #{tpu_custom_call.1} parent=1 // pred_fallthru
      _
    // Predicated region
    $region10: #{tpu_custom_call.1} parent=1 // pred_check
      _
    $region11: #{tpu_custom_call.1} parent=1 // pred_check_branch
      %37 = sbr.rel (0) target = $region13
    $region12: #{tpu_custom_call.1} parent=1 // pred_region
      %39 = dma.done [#allocation3], 256
    $region13: #{tpu_custom_call.1} parent=1 // pred_fallthru
      _
    // Predicated region
    $region14: #{tpu_custom_call.1} parent=1 // pred_check
      _
    $region15: #{tpu_custom_call.1} parent=1 // pred_check_branch
      %41 = sbr.rel (0) target = $region17
    $region16: #{tpu_custom_call.1} parent=1 // pred_region
      %43 = dma.done [#allocation6], 256
    $region17: #{tpu_custom_call.1} parent=1 // pred_fallthru
      _
    %v44 = vld [vmem:[#allocation2] sm:$0xff]
    %v45 = vld [vmem:[#allocation2 + $0x8] sm:$0xff]
    %v46 = vld [vmem:[#allocation5] sm:$0xff]
    %v47 = vld [vmem:[#allocation5 + $0x8] sm:$0xff]
    %v48 = vmax.f32 %v44, 0.0
    %v49 = vmax.f32 %v45, 0.0
    %v50 = vmul.f32 %v44, %v46
    %v51 = vmul.f32 %v45, %v47
    %v52 = vsub.f32 %v48, %v50
    %v53 = vsub.f32 %v49, %v51
    %v54 = vand.u32 2147483647, %v44
    %v55 = vand.u32 2147483647, %v45
    %v56 = vsub.f32 0.0, %v54
    %v57 = vsub.f32 0.0, %v55
    %v58 = vmul.f32 %v56, 1.442695
    %v59 = vpow.pop %v58
    %v60 = vmul.f32 %v57, 1.442695
    %v61 = vpow.pop %v60
    %v62 = vadd.f32 %v59, 1.0
    %v63 = vlog2.pop %v62
    %v64 = vmul.f32 %v63, 0.6931472
    %v65 = vmul.f32 -0.5, %v59
    %v66 = vadd.f32 %v65, 1.0
    %v67 = vmul.f32 %v66, %v59
    %v68 = vand.u32 2147483647, %v59
    %vm69 = vcmp.lt.f32.partialorder %v68, 0.0004427343
    %v70 = vsel %vm69, %v67, %v64
    %v71 = vadd.f32 %v61, 1.0
    %v72 = vlog2.pop %v71
    %v73 = vmul.f32 %v72, 0.6931472
    %v74 = vmul.f32 -0.5, %v61
    %v75 = vadd.f32 %v74, 1.0
    %v76 = vmul.f32 %v75, %v61
    %v77 = vand.u32 2147483647, %v61
    %vm78 = vcmp.lt.f32.partialorder %v77, 0.0004427343
    %v79 = vsel %vm78, %v76, %v73
    %v80 = vadd.f32 %v52, %v70
    %v81 = vadd.f32 %v53, %v79
    %v82 = vsub.f32 0.0, %v80
    %v83 = vsub.f32 0.0, %v81
    %v84 = vmul.f32 %v82, 1.442695
    %v85 = vpow.pop %v84
    %v86 = vmul.f32 %v83, 1.442695
    %v87 = vpow.pop %v86
    %v88 = vsub.f32 1.0, %v85
    %v89 = vsub.f32 1.0, %v87
    %v90 = vmax.f32 %v88, 0.0
    %v91 = vmax.f32 %v89, 0.0
    %v92 = vrsqrt.pop %v90
    %v93 = vmul.f32 %v92, %v90
    %v94 = vmul.f32 %v93, %v92
    %v95 = vmul.f32 0.5, %v94
    %v96 = vsub.f32 1.5, %v95
    %v97 = vmul.f32 %v92, %v96
    %v98 = vmul.f32 %v90, %v97
    %vm99 = vcmp.eq.f32.partialorder %v90, inf
    %v100 = vsel %vm99, %v90, %v98
    %vm101 = vcmp.eq.f32.partialorder %v90, 0.0
    %v102 = vand.u32 %v90, 2147483648
    %v103 = vsel %vm101, %v102, %v100
    %v104 = vrsqrt.pop %v91
    %v105 = vmul.f32 %v104, %v91
    %v106 = vmul.f32 %v105, %v104
    %v107 = vmul.f32 0.5, %v106
    %v108 = vsub.f32 1.5, %v107
    %v109 = vmul.f32 %v104, %v108
    %v110 = vmul.f32 %v91, %v109
    %vm111 = vcmp.eq.f32.partialorder %v91, inf
    %v112 = vsel %vm111, %v91, %v110
    %vm113 = vcmp.eq.f32.partialorder %v91, 0.0
    %v114 = vand.u32 %v91, 2147483648
    %v115 = vsel %vm113, %v114, %v112
    %v116 = vmul.f32 %v90, %v103
    %v117 = vmul.f32 %v91, %v115
    %v118 = vmul.f32 %v116, %v80
    %v119 = vmul.f32 %v117, %v81
    %v120 = vadd.f32 %v118, %v119
    %121 = vst [vmem:[#allocation7] sm:$0xff] %v120
    // Predicated region
    $region18: #{tpu_custom_call.1} parent=1 // pred_check
      _
    $region19: #{tpu_custom_call.1} parent=1 // pred_check_branch
      %123 = sbr.rel (0) target = $region21
    $region20: #{tpu_custom_call.1} parent=1 // pred_region
      %125 = vsyncadd [#allocation4], 0
      %s127 = sshll.u32 [#allocation7], 4
      %s128 = int_to_ptr.vmem [resolvable:$true] %s127
      %s129 = sshll.u32 %s2, 4
      %s130 = int_to_ptr.hbm [resolvable:$true] %s129
      %132 = dma.vmem_to_hbm [thread:$0]  %s128, 128, %s130, [#allocation4]
    $region21: #{tpu_custom_call.1} parent=1 // pred_fallthru
      _
    // Predicated region
    $region22: #{tpu_custom_call.1} parent=1 // pred_check
      _
    $region23: #{tpu_custom_call.1} parent=1 // pred_check_branch
      %134 = sbr.rel (0) target = $region25
    $region24: #{tpu_custom_call.1} parent=1 // pred_region
      %136 = dma.done [#allocation4], 128
    $region25: #{tpu_custom_call.1} parent=1 // pred_fallthru
      _
    %137 = vsyncpa [#allocation3], 1
    %138 = vsyncpa [#allocation6], 1
    %139 = vsyncpa [#allocation4], 1

</llo_original>
